<compile_context>
chip_gen: v6e
topology: v6e:2x2x1
jax: 0.10.0
libtpu: 0.0.40
codegen_flags: <defaults>
</compile_context>

<pallas_src>
import jax
import jax.numpy as jnp
from jax.experimental import pallas as pl
from jax.experimental.pallas import tpu as pltpu

C_IN = 64
C_OUT = 240


def relu_conv1x1_hardsigmoid_kernel(x_ref, w_ref, b_ref, o_ref):
    # x_ref: (M, C_in) f32   w_ref: (C_in, C_out) bf16 (hardsigmoid 1/6 folded)
    # b_ref: (1, C_out) f32 (b/6 + 1/2 folded)        o_ref: (M, C_out) f32
    x = jnp.maximum(x_ref[...], 0.0)                       # ReLU (VPU, f32)
    xb = x.astype(jnp.bfloat16)                            # bf16 feed for the MXU
    y = jnp.dot(xb, w_ref[...],
                preferred_element_type=jnp.float32)        # 1x1 conv == matmul (MXU, f32 acc)
    # Hardsigmoid scale/shift already folded into w/b -> only a clip remains (f32 epilogue).
    o_ref[...] = jnp.clip(y + b_ref[...], 0.0, 1.0)


def prepare_params(w_oi, b_o):
    """One-time (init-time) parameter preparation, out of the per-call hot path.

    w_oi: (C_out, C_in) conv weight (1x1 kernel squeezed); b_o: (C_out,).
    Returns:
      w2d: (C_in, C_out) bf16 with the hardsigmoid 1/6 folded in
      b2d: (1, C_out)   f32 with b/6 + 1/2 folded in
    so that  clip((x @ w.T + b)/6 + 1/2, 0, 1) == clip(x @ w2d + b2d, 0, 1).
    """
    c_out, c_in = w_oi.shape
    assert (c_out, c_in) == (C_OUT, C_IN), (c_out, c_in)
    w2d = (jnp.transpose(w_oi).astype(jnp.float32) * (1.0 / 6.0)).astype(jnp.bfloat16)
    b2d = (b_o.astype(jnp.float32) * (1.0 / 6.0) + 0.5).reshape(1, c_out)
    return w2d, b2d


def relu_conv1x1_hardsigmoid(x_nchw, w2d, b2d):
    """x_nchw: (N, C_in, H, W); w2d: (C_in, C_out) bf16; b2d: (1, C_out) f32.
    Returns (N, C_out, H, W) f32."""
    n, c_in, h, w = x_nchw.shape
    m = n * h * w
    # General NHWC flatten -> (M, C_in); correct for any H, W (here h = w = 1).
    x2d = jnp.transpose(x_nchw, (0, 2, 3, 1)).reshape(m, c_in)

    cost = pl.CostEstimate(
        flops=2 * m * c_in * C_OUT,
        transcendentals=0,
        bytes_accessed=(4 * m * c_in          # x   (f32)
                        + 2 * c_in * C_OUT    # w   (bf16)
                        + 4 * C_OUT           # b   (f32)
                        + 4 * m * C_OUT),     # out (f32)
    )

    out2d = pl.pallas_call(
        relu_conv1x1_hardsigmoid_kernel,
        out_shape=jax.ShapeDtypeStruct((m, C_OUT), jnp.float32),
        in_specs=[
            pl.BlockSpec(memory_space=pltpu.MemorySpace.VMEM),
            pl.BlockSpec(memory_space=pltpu.MemorySpace.VMEM),
            pl.BlockSpec(memory_space=pltpu.MemorySpace.VMEM),
        ],
        out_specs=pl.BlockSpec(memory_space=pltpu.MemorySpace.VMEM),
        cost_estimate=cost,
    )(x2d, w2d, b2d)

    # (M, C_out) -> (N, H, W, C_out) -> (N, C_out, H, W). For h = w = 1 these are
    # metadata-only reshapes (no data movement, no extra slice HLO).
    return jnp.transpose(out2d.reshape(n, h, w, C_OUT), (0, 3, 1, 2))


if __name__ == "__main__":
    key = jax.random.PRNGKey(0)
    k_x, k_w, k_b = jax.random.split(key, 3)

    # Input matching the module: torch.randn([1, 64, 1, 1])
    x = jax.random.normal(k_x, (1, C_IN, 1, 1), dtype=jnp.float32)

    # Deterministic conv params: Conv2d(64, 240, 1x1) -> weight (240, 64), bias (240,)
    # PyTorch-style uniform init bound = 1/sqrt(fan_in)
    bound = 1.0 / jnp.sqrt(jnp.float32(C_IN))
    w = jax.random.uniform(k_w, (C_OUT, C_IN), dtype=jnp.float32,
                           minval=-bound, maxval=bound)
    b = jax.random.uniform(k_b, (C_OUT,), dtype=jnp.float32,
                           minval=-bound, maxval=bound)

    # One-time parameter prep (hoisted out of the per-call hot path).
    w2d, b2d = jax.block_until_ready(prepare_params(w, b))

    fwd = jax.jit(relu_conv1x1_hardsigmoid)
    out = fwd(x, w2d, b2d)
    jax.block_until_ready(out)

    # Sanity check against a pure-JAX f32 reference of the original (unfolded) math.
    # Tolerance relaxed (bf16 weights/activations feed the MXU; accumulation is f32).
    x_ref = jnp.maximum(x.reshape(1, C_IN), 0.0)
    y_ref = x_ref @ w.T + b
    ref = jnp.clip(y_ref / 6.0 + 0.5, 0.0, 1.0).reshape(1, C_OUT, 1, 1)
    assert out.shape == (1, C_OUT, 1, 1)
    assert jnp.allclose(out, ref, atol=2e-2), "mismatch vs reference"

    print("KERNEL_OK")
</pallas_src>

<mosaic_0001>
module attributes {stable_mosaic.version = 11 : i64} {
  func.func @relu_conv1x1_hardsigmoid_kernel(%arg0: memref<1x64xf32, #tpu.memory_space<vmem>>, %arg1: memref<64x240xbf16, #tpu.memory_space<vmem>>, %arg2: memref<1x240xf32, #tpu.memory_space<vmem>>, %arg3: memref<1x240xf32, #tpu.memory_space<vmem>>) attributes {dimension_semantics = [], scalar_prefetch = 0 : i64, scratch_operands = 0 : i64, tpu.core_type = #tpu.core_type<tc>} {
    %c0 = arith.constant 0 : index
    %c0_0 = arith.constant 0 : index
    %0 = vector.load %arg0[%c0, %c0_0] : memref<1x64xf32, #tpu.memory_space<vmem>>, vector<1x64xf32>
    %cst = arith.constant 0.000000e+00 : f32
    %1 = vector.broadcast %cst : f32 to vector<1x64xf32>
    %2 = arith.maximumf %0, %1 : vector<1x64xf32>
    %3 = arith.truncf %2 : vector<1x64xf32> to vector<1x64xbf16>
    %c0_1 = arith.constant 0 : index
    %c0_2 = arith.constant 0 : index
    %4 = vector.load %arg1[%c0_1, %c0_2] : memref<64x240xbf16, #tpu.memory_space<vmem>>, vector<64x240xbf16>
    %cst_3 = arith.constant dense<0.000000e+00> : vector<1x240xf32>
    %5 = tpu.matmul %3, %4, %cst_3 {dimension_numbers = #tpu.dot_dimension_numbers<[1], [0], [0], [1], [0, 0, 1, 1], [], []>} : vector<1x64xbf16>, vector<64x240xbf16>, vector<1x240xf32> -> vector<1x240xf32>
    %c0_4 = arith.constant 0 : index
    %c0_5 = arith.constant 0 : index
    %6 = vector.load %arg2[%c0_4, %c0_5] : memref<1x240xf32, #tpu.memory_space<vmem>>, vector<1x240xf32>
    %7 = arith.addf %5, %6 : vector<1x240xf32>
    %cst_6 = arith.constant 0.000000e+00 : f32
    %cst_7 = arith.constant 1.000000e+00 : f32
    %8 = vector.broadcast %cst_6 : f32 to vector<1x240xf32>
    %9 = arith.maximumf %8, %7 : vector<1x240xf32>
    %10 = vector.broadcast %cst_7 : f32 to vector<1x240xf32>
    %11 = arith.minimumf %10, %9 : vector<1x240xf32>
    %c0_8 = arith.constant 0 : index
    %c0_9 = arith.constant 0 : index
    %12 = vector.load %arg3[%c0_8, %c0_9] : memref<1x240xf32, #tpu.memory_space<vmem>>, vector<1x240xf32>
    tpu.vector_store %arg3[%c0_8, %c0_9], %11 {strides = array<i32>} : memref<1x240xf32, #tpu.memory_space<vmem>>, vector<1x240xf32>,
    return
  }
}

</mosaic_0001>

<llo_original>
// kernel: relu_conv1x1_hardsigmoid.1
$region0: #{relu_conv1x1_hardsigmoid.1}
  #allocation0 [shape = 'u32[]', space=smem, size = 0x4, offset = 0x4, fixed_abs, tag = 'smem constant byte address 0x4 - core index']
  #allocation1 [shape = 'u32[144,128]{1,0:T(1,128)}', space=vmem, size = 0x12000, scoped, tag = 'internal scratch']
  %s0 = inlined_call_operand.vmem [shape: f32[1,64], index: 0, kind: input, shape index: {}]
  %s1 = inlined_call_operand.hbm [shape: bf16[64,240], index: 1, kind: input, shape index: {}]
  %s2 = inlined_call_operand.vmem [shape: f32[1,240], index: 2, kind: input, shape index: {}]
  %s3 = inlined_call_operand.hbm [shape: f32[1,240], index: 3, kind: output, shape index: {}]
  %s4 = sld [smem:[#allocation0]]
  $region26: #{relu_conv1x1_hardsigmoid.1} parent=0
    _
  %s6 = ssub.s32 1, %s4
  %s7 = scalar_select 0, %s6, %s4
  $region1: #{relu_conv1x1_hardsigmoid.1} parent=0
    #allocation2 [shape = 'u8[32768]{0}', space=vmem, size = 0x8000, scoped, tag = 'input window, operand 1, single buffered']
    #allocation3 [shape = 's32[1]{0}', space=sflag, size = 0x4, scoped, tag = 'scoped memory for relu_conv1x1_hardsigmoid.1']
    #allocation4 [shape = 's32[1]{0}', space=sflag, size = 0x4, scoped, tag = 'scoped memory for relu_conv1x1_hardsigmoid.1']
    #allocation5 [shape = 'u8[1024]{0}', space=vmem, size = 0x400, scoped, tag = 'output window, operand 0, single buffered']
    %8 = vsyncpa [#allocation3], 0
    %9 = vsyncpa [#allocation4], 0
    // Predicated region
    $region2: #{relu_conv1x1_hardsigmoid.1} parent=1 // pred_check
      _
    $region3: #{relu_conv1x1_hardsigmoid.1} parent=1 // pred_check_branch
      %11 = sbr.rel (0) target = $region5
    $region4: #{relu_conv1x1_hardsigmoid.1} parent=1 // pred_region
      _
    $region5: #{relu_conv1x1_hardsigmoid.1} parent=1 // pred_fallthru
      _
    // Predicated region
    $region6: #{relu_conv1x1_hardsigmoid.1} parent=1 // pred_check
      _
    $region7: #{relu_conv1x1_hardsigmoid.1} parent=1 // pred_check_branch
      %13 = sbr.rel (0) target = $region9
    $region8: #{relu_conv1x1_hardsigmoid.1} parent=1 // pred_region
      %s15 = ssub.s32 1024, 1024
      %16 = vsyncadd [#allocation3], %s15
      %s17 = sshll.u32 [#allocation2], 4
      %s18 = int_to_ptr.vmem [resolvable:$true] %s17
      %23 = dma.hbm_to_vmem [thread:$0]  %s1, 1024, %s18, [#allocation3], 128, 128, 8
    $region9: #{relu_conv1x1_hardsigmoid.1} parent=1 // pred_fallthru
      _
    // Predicated region
    $region10: #{relu_conv1x1_hardsigmoid.1} parent=1 // pred_check
      _
    $region11: #{relu_conv1x1_hardsigmoid.1} parent=1 // pred_check_branch
      %25 = sbr.rel (0) target = $region13
    $region12: #{relu_conv1x1_hardsigmoid.1} parent=1 // pred_region
      _
    $region13: #{relu_conv1x1_hardsigmoid.1} parent=1 // pred_fallthru
      _
    // Predicated region
    $region14: #{relu_conv1x1_hardsigmoid.1} parent=1 // pred_check
      _
    $region15: #{relu_conv1x1_hardsigmoid.1} parent=1 // pred_check_branch
      %27 = sbr.rel (0) target = $region17
    $region16: #{relu_conv1x1_hardsigmoid.1} parent=1 // pred_region
      %28 = dma.done [#allocation3], 1024
    $region17: #{relu_conv1x1_hardsigmoid.1} parent=1 // pred_fallthru
      _
    %v30 = vld [vmem:[%s0] sm:$0x1]
    %v31 = vmax.f32 %v30, 0.0
    %v32 = vpack.c.bf16 %v31, %v31
    %v33 = vld [vmem:[#allocation2] sm:$0xff]
    %v34 = vld [vmem:[#allocation2 + $0x8] sm:$0xff]
    %v35 = vld [vmem:[#allocation2 + $0x10] sm:$0xff]
    %v36 = vld [vmem:[#allocation2 + $0x18] sm:$0xff]
    %v37 = vld [vmem:[#allocation2 + $0x20] sm:$0xff]
    %v38 = vld [vmem:[#allocation2 + $0x28] sm:$0xff]
    %v39 = vld [vmem:[#allocation2 + $0x30] sm:$0xff]
    %v40 = vld [vmem:[#allocation2 + $0x38] sm:$0xff]
    %v41 = vld [vmem:[%s2] sm:$0x3]
    %v50 = vunpack.c.l.b16 %v33
    %v51 = vunpack.c.h.b16 %v33
    %v52 = vunpack.c.l.b16 %v34
    %v53 = vunpack.c.h.b16 %v34
    %v54 = vunpack.c.l.b16 %v35
    %v55 = vunpack.c.h.b16 %v35
    %v56 = vunpack.c.l.b16 %v36
    %v57 = vunpack.c.h.b16 %v36
    %v58 = vunpack.c.l.b16 %v37
    %v59 = vunpack.c.h.b16 %v37
    %v60 = vunpack.c.l.b16 %v38
    %v61 = vunpack.c.h.b16 %v38
    %v62 = vunpack.c.l.b16 %v39
    %v63 = vunpack.c.h.b16 %v39
    %v64 = vunpack.c.l.b16 %v40
    %v65 = vunpack.c.h.b16 %v40
    %v66 = vpack.c.b16 %v52, %v50
    %v67 = vpack.c.b16 %v53, %v51
    %v68 = vpack.c.b16 %v56, %v54
    %v69 = vpack.c.b16 %v57, %v55
    %v70 = vpack.c.b16 %v60, %v58
    %v71 = vpack.c.b16 %v61, %v59
    %v72 = vpack.c.b16 %v64, %v62
    %v73 = vpack.c.b16 %v65, %v63
    %v83 = vlaneseq
    %v84 = vshrl.u32 %v83, 7
    %v85 = vsub.s32 0, %v84
    %v86 = vrot.slane %v41, %v85
    %v87 = vlaneseq
    %v88 = vshrl.u32 %v87, 7
    %v89 = vsub.s32 1, %v88
    %v90 = vrot.slane %v41, %v89
    %vm93 = vcmask 523264
    %v95 = vsel %vm93, %v32, 0
    %97 = vmatprep.subr.bf16.mxu0 0
    %98 = vmatpush1.bf16.msra.mxu0 0
    %99 = vmatprep.subr.bf16.mxu0 0
    %100 = vmatpush1.bf16.msra.mxu0 0
    %101 = vmatprep.subr.bf16.mxu0 0
    %102 = vmatpush1.bf16.msra.mxu0 0
    %103 = vmatprep.subr.bf16.mxu0 0
    %104 = vmatpush1.bf16.msra.mxu0 0
    %105 = vmatprep.subr.bf16.mxu0 %v73
    %106 = vmatpush1.bf16.msra.mxu0 %v72
    %107 = vmatprep.subr.bf16.mxu0 %v71
    %108 = vmatpush1.bf16.msra.mxu0 %v70
    %109 = vmatprep.subr.bf16.mxu0 %v69
    %110 = vmatpush1.bf16.msra.mxu0 %v68
    %111 = vmatprep.subr.bf16.mxu0 %v67
    %112 = vmatpush1.bf16.msra.mxu0 %v66
    %113 = vmatprep.subr.bf16.mxu0 0
    %114 = vmatpush2.bf16.msra.mxu0 0
    %115 = vmatprep.subr.bf16.mxu0 0
    %116 = vmatpush2.bf16.msra.mxu0 0
    %117 = vmatprep.subr.bf16.mxu0 0
    %118 = vmatpush2.bf16.msra.mxu0 0
    %119 = vmatprep.subr.bf16.mxu0 0
    %120 = vmatpush2.bf16.msra.mxu0 0
    %121 = vmatprep.subr.bf16.mxu0 0
    %122 = vmatpush2.bf16.msra.mxu0 0
    %123 = vmatprep.subr.bf16.mxu0 0
    %124 = vmatpush2.bf16.msra.mxu0 0
    %125 = vmatprep.subr.bf16.mxu0 0
    %126 = vmatpush2.bf16.msra.mxu0 0
    %127 = vmatprep.subr.bf16.mxu0 0
    %128 = vmatpush2.bf16.msra.mxu0 0
    %129 = vmatprep.mubr.bf16.mxu0 0
    %130 = vmatmul.mubr.bf16.gmra.mxu0 %v95
    %v131 = vpop.f32.mrf.mxu0
    %v132 = vadd.f32 %v86, %v131
    %v133 = vpop.f32.mrf.mxu0
    %v134 = vadd.f32 %v90, %v133
    %v135 = vpop.f32.mrf.mxu0
    %v136 = vpop.f32.mrf.mxu0
    %137 = vdwg.mxu0
    %v138 = vmax.f32 %v132, 0.0
    %v139 = vmax.f32 %v134, 0.0
    %v140 = vmin.f32 %v138, 1.0
    %v141 = vmin.f32 %v139, 1.0
    %v144 = vcombine.low %v140, %v141
    %v146 = vunpack.c.l.s4 1966171168
    %v147 = vunpack.c.0.s8 %v146
    %v148 = vlaneseq
    %v149 = vshrl.u32 %v148, 7
    %v150 = vsub.s32 %v147, %v149
    %v151 = vrot.slane %v144, %v150
    %v153 = vunpack.c.l.s4 1966171168
    %v154 = vunpack.c.0.s8 %v153
    %v155 = vlaneseq
    %v156 = vshrl.u32 %v155, 7
    %v157 = vsub.s32 %v154, %v156
    %v158 = vrot.slane %v151, %v157
    %v160 = vlaneseq
    %vm161 = vcmp.ge.s32.totalorder %v160, 0
    %vm162 = vcmp.lt.s32.totalorder %v160, 240
    %vm163 = vmand %vm161, %vm162
    %164 = vst.msk [vmem:[#allocation5] sm:$0x3] %vm163, %v158
    // Predicated region
    $region18: #{relu_conv1x1_hardsigmoid.1} parent=1 // pred_check
      _
    $region19: #{relu_conv1x1_hardsigmoid.1} parent=1 // pred_check_branch
      %166 = sbr.rel (0) target = $region21
    $region20: #{relu_conv1x1_hardsigmoid.1} parent=1 // pred_region
      %s168 = ssub.s32 32, 32
      %169 = vsyncadd [#allocation4], %s168
      %s171 = sshll.u32 [#allocation5], 4
      %s172 = int_to_ptr.vmem [resolvable:$true] %s171
      %174 = dma.vmem_to_hbm [thread:$0]  %s172, 32, %s3, [#allocation4]
    $region21: #{relu_conv1x1_hardsigmoid.1} parent=1 // pred_fallthru
      _
    // Predicated region
    $region22: #{relu_conv1x1_hardsigmoid.1} parent=1 // pred_check
      _
    $region23: #{relu_conv1x1_hardsigmoid.1} parent=1 // pred_check_branch
      %176 = sbr.rel (0) target = $region25
    $region24: #{relu_conv1x1_hardsigmoid.1} parent=1 // pred_region
      %177 = dma.done [#allocation4], 32
    $region25: #{relu_conv1x1_hardsigmoid.1} parent=1 // pred_fallthru
      _
    %178 = vsyncpa [#allocation3], 1
    %179 = vsyncpa [#allocation4], 1

</llo_original>
